<compile_context>
chip_gen: v6e
topology: v6e:2x2x1
jax: 0.10.0
libtpu: 0.0.40
codegen_flags: <defaults>
</compile_context>

<pallas_src>
import functools

import jax
import jax.numpy as jnp
from jax.experimental import pallas as pl
from jax.experimental.pallas import tpu as pltpu


# ----------------------------------------------------------------------------
# Shared in-kernel math (pure value functions, called from the kernels)
# ----------------------------------------------------------------------------
def _eye_mask(n):
    return (jax.lax.broadcasted_iota(jnp.int32, (n, n), 0) ==
            jax.lax.broadcasted_iota(jnp.int32, (n, n), 1))


def _row_to_col(row, n):
    """(1, N) lane vector -> (N, 1) sublane vector via diag mask + lane reduce."""
    diag = jnp.where(_eye_mask(n), jnp.broadcast_to(row, (n, n)), 0.0)
    return jnp.sum(diag, axis=1, keepdims=True)


def _col_to_row(col, n):
    """(N, 1) sublane vector -> (1, N) lane vector via diag mask + sublane reduce."""
    diag = jnp.where(_eye_mask(n), jnp.broadcast_to(col, (n, n)), 0.0)
    return jnp.sum(diag, axis=0, keepdims=True)


def _ema_write(mem, times_row, obs, assign_row, momentum, frame):
    """EMA scatter-write of observations into their assigned slots."""
    n_slots = mem.shape[0]
    m_obs = obs.shape[0]

    # Transposed one-hot (N, M): slot index on sublanes, observation on lanes.
    slot_iota = jax.lax.broadcasted_iota(jnp.int32, (n_slots, m_obs), 0)
    onehot_t = jnp.where(slot_iota == assign_row, 1.0, 0.0)            # (N, M) f32

    # Scatter on the MXU in bf16 (one-hot is exact in bf16), f32 accumulate.
    scatter = jnp.dot(onehot_t.astype(jnp.bfloat16),
                      obs.astype(jnp.bfloat16),
                      preferred_element_type=jnp.float32)              # (N, D)

    # Per-slot presence: VPU/XLU reduction (no second MXU matmul), clamped to
    # [0, 1] so duplicate assignments cannot over-subtract the EMA / timestamps.
    presence_col = jnp.minimum(
        jnp.sum(onehot_t, axis=1, keepdims=True), 1.0)                 # (N, 1)
    presence_row = _col_to_row(presence_col, n_slots)                  # (1, N)

    alpha = 1.0 - momentum
    new_mem = mem * (1.0 - alpha * presence_col) + alpha * scatter
    new_times = times_row * (1.0 - presence_row) + frame * presence_row
    return new_mem, new_times


def _decayed_read(mem, times_row, proj, frame, decay):
    """Time-decayed readout followed by a learned projection (bf16 MXU)."""
    n_slots = mem.shape[0]
    w_row = jnp.exp(-decay * (frame - times_row))                      # (1, N) EUP
    w_col = _row_to_col(w_row, n_slots)                                # (N, 1)
    x = (mem * w_col).astype(jnp.bfloat16)
    return jnp.dot(x, proj.astype(jnp.bfloat16),
                   preferred_element_type=jnp.float32)                 # (N, D)


# ----------------------------------------------------------------------------
# Pallas kernels
# ----------------------------------------------------------------------------
def _write_kernel(mem_ref, times_ref, obs_ref, assign_ref, mom_ref, frame_ref,
                  out_mem_ref, out_times_ref):
    new_mem, new_times = _ema_write(mem_ref[...], times_ref[...], obs_ref[...],
                                    assign_ref[...], mom_ref[0], frame_ref[0])
    out_mem_ref[...] = new_mem
    out_times_ref[...] = new_times


def _read_kernel(mem_ref, times_ref, proj_ref, frame_ref, decay_ref, out_ref):
    out_ref[...] = _decayed_read(mem_ref[...], times_ref[...], proj_ref[...],
                                 frame_ref[0], decay_ref[0])


def _write_read_kernel(mem_ref, times_ref, obs_ref, assign_ref, proj_ref,
                       mom_ref, wframe_ref, rframe_ref, decay_ref,
                       out_mem_ref, out_times_ref, out_read_ref):
    """Fused write + read: the freshly written state never round-trips HBM."""
    new_mem, new_times = _ema_write(mem_ref[...], times_ref[...], obs_ref[...],
                                    assign_ref[...], mom_ref[0], wframe_ref[0])
    out_mem_ref[...] = new_mem
    out_times_ref[...] = new_times
    out_read_ref[...] = _decayed_read(new_mem, new_times, proj_ref[...],
                                      rframe_ref[0], decay_ref[0])


# ----------------------------------------------------------------------------
# pallas_call wrappers (single invocation; full arrays fit one VMEM block).
# TODO(synk): for large slot banks, add a ("parallel",) grid over the slot
#             axis (TILE_N rows per block, proj kept resident).
# ----------------------------------------------------------------------------
_VMEM = pl.BlockSpec(memory_space=pltpu.VMEM)
_SMEM = pl.BlockSpec(memory_space=pltpu.SMEM)


def _write_costs(n, d, m):
    flops = 2 * n * m * d + 8 * n * d + 2 * n * n
    nbytes = 4 * (2 * n * d + 2 * n + m * d + m + 2)
    return flops, 0, nbytes


def _read_costs(n, d):
    flops = 2 * n * d * d + 4 * n * d + 2 * n * n
    nbytes = 4 * (2 * n * d + d * d + n + 2)
    return flops, n, nbytes


@functools.partial(jax.jit, donate_argnums=(0, 1))
def memory_write(mem_feats, mem_times, obs_feats, assign_row, momentum, frame):
    n, d = mem_feats.shape
    m = obs_feats.shape[0]
    flops, trans, nbytes = _write_costs(n, d, m)
    return pl.pallas_call(
        _write_kernel,
        out_shape=(jax.ShapeDtypeStruct((n, d), jnp.float32),
                   jax.ShapeDtypeStruct((1, n), jnp.float32)),
        in_specs=[_VMEM, _VMEM, _VMEM, _VMEM, _SMEM, _SMEM],
        out_specs=(_VMEM, _VMEM),
        input_output_aliases={0: 0, 1: 1},     # in-place state update (P8)
        cost_estimate=pl.CostEstimate(flops=flops, transcendentals=trans,
                                      bytes_accessed=nbytes),
    )(mem_feats, mem_times, obs_feats, assign_row, momentum, frame)


@jax.jit
def memory_read(mem_feats, mem_times, proj_w, frame, decay):
    n, d = mem_feats.shape
    flops, trans, nbytes = _read_costs(n, d)
    return pl.pallas_call(
        _read_kernel,
        out_shape=jax.ShapeDtypeStruct((n, d), jnp.float32),
        in_specs=[_VMEM, _VMEM, _VMEM, _SMEM, _SMEM],
        out_specs=_VMEM,
        cost_estimate=pl.CostEstimate(flops=flops, transcendentals=trans,
                                      bytes_accessed=nbytes),
    )(mem_feats, mem_times, proj_w, frame, decay)


@functools.partial(jax.jit, donate_argnums=(0, 1))
def memory_write_read(mem_feats, mem_times, obs_feats, assign_row, proj_w,
                      momentum, write_frame, read_frame, decay):
    n, d = mem_feats.shape
    m = obs_feats.shape[0]
    wf, wt, wb = _write_costs(n, d, m)
    rf, rt, rb = _read_costs(n, d)
    return pl.pallas_call(
        _write_read_kernel,
        out_shape=(jax.ShapeDtypeStruct((n, d), jnp.float32),
                   jax.ShapeDtypeStruct((1, n), jnp.float32),
                   jax.ShapeDtypeStruct((n, d), jnp.float32)),
        in_specs=[_VMEM, _VMEM, _VMEM, _VMEM, _VMEM, _SMEM, _SMEM, _SMEM, _SMEM],
        out_specs=(_VMEM, _VMEM, _VMEM),
        input_output_aliases={0: 0, 1: 1},
        cost_estimate=pl.CostEstimate(
            flops=wf + rf, transcendentals=wt + rt,
            bytes_accessed=wb + rb - 4 * (n * d + n)),
    )(mem_feats, mem_times, obs_feats, assign_row, proj_w,
      momentum, write_frame, read_frame, decay)


# ----------------------------------------------------------------------------
# TrackletMemory + _MemoryReadWriter equivalents
# ----------------------------------------------------------------------------
class TrackletMemory:
    """Stateful tracklet memory (synthetic stand-in for unitrack.TrackletMemory)."""

    def __init__(self, num_slots=64, feature_dim=128, momentum=0.9, decay=0.1):
        self.num_slots = num_slots
        self.feature_dim = feature_dim
        key = jax.random.PRNGKey(0)
        k_mem, k_proj = jax.random.split(key)
        self.mem_feats = jax.random.normal(
            k_mem, (num_slots, feature_dim), jnp.float32) * 0.02
        self.mem_times = jnp.zeros((1, num_slots), jnp.float32)   # lane-dense
        self.proj_w = jax.random.normal(
            k_proj, (feature_dim, feature_dim), jnp.float32) / jnp.sqrt(
                jnp.float32(feature_dim))
        self.momentum = jnp.full((1,), momentum, jnp.float32)
        self.decay = jnp.full((1,), decay, jnp.float32)

    def write(self, ctx, obs, new):
        frame = jnp.asarray(ctx["frame"], jnp.float32).reshape(1)
        obs_feats = obs["features"]
        assign_row = obs["indices"].astype(jnp.int32).reshape(1, -1)
        # TODO(synk): `new` (newly spawned tracklets) would allocate fresh slots
        # in the real unitrack memory; not modelled here.
        del new
        new_mem, new_times = memory_write(
            self.mem_feats, self.mem_times, obs_feats, assign_row,
            self.momentum, frame)
        self.mem_feats, self.mem_times = new_mem, new_times
        return new_mem, new_times

    def read(self, frame):
        frame = jnp.asarray(frame, jnp.float32).reshape(1)
        return memory_read(self.mem_feats, self.mem_times, self.proj_w,
                           frame, self.decay)

    def write_read(self, ctx, obs, new, read_frame):
        """Fused write+read (single Pallas dispatch; state stays in VMEM)."""
        wframe = jnp.asarray(ctx["frame"], jnp.float32).reshape(1)
        rframe = jnp.asarray(read_frame, jnp.float32).reshape(1)
        obs_feats = obs["features"]
        assign_row = obs["indices"].astype(jnp.int32).reshape(1, -1)
        del new  # TODO(synk): spawned-tracklet slot allocation not modelled
        new_mem, new_times, readout = memory_write_read(
            self.mem_feats, self.mem_times, obs_feats, assign_row, self.proj_w,
            self.momentum, wframe, rframe, self.decay)
        self.mem_feats, self.mem_times = new_mem, new_times
        return new_mem, new_times, readout


class MemoryReadWriter:
    """JAX/Pallas equivalent of `_MemoryReadWriter.forward`."""

    def __init__(self, memory: TrackletMemory):
        self.memory = memory

    def __call__(self, write: bool, transaction):
        if write:
            ctx, obs, new = transaction
            return self.memory.write(ctx, obs, new)
        else:
            (frame,) = transaction
            return self.memory.read(frame)


# ----------------------------------------------------------------------------
# Pure-JAX reference (for a silent sanity check)
# ----------------------------------------------------------------------------
def _write_ref(mem, times_row, obs, assign, momentum, frame):
    n = mem.shape[0]
    onehot = (assign.reshape(-1, 1) ==
              jnp.arange(n)[None, :]).astype(jnp.float32)          # (M, N)
    scatter = onehot.T @ obs
    presence_row = jnp.minimum(onehot.sum(0, keepdims=True), 1.0)  # (1, N)
    presence_col = presence_row.T                                   # (N, 1)
    alpha = 1.0 - momentum
    new_mem = mem * (1.0 - alpha * presence_col) + alpha * scatter
    new_times = times_row * (1.0 - presence_row) + frame * presence_row
    return new_mem, new_times


def _read_ref(mem, times_row, proj, frame, decay):
    w_col = jnp.exp(-decay * (frame - times_row)).T                 # (N, 1)
    return (mem * w_col) @ proj


# ----------------------------------------------------------------------------
if __name__ == "__main__":
    N_SLOTS, DIM, M_OBS = 64, 128, 8

    memory = TrackletMemory(num_slots=N_SLOTS, feature_dim=DIM)
    rw = MemoryReadWriter(memory)

    key = jax.random.PRNGKey(0)
    k_obs, k_new = jax.random.split(key)
    obs_feats = jax.random.normal(k_obs, (M_OBS, DIM), jnp.float32)
    obs_idx = jnp.array([3, 7, 12, 20, 25, 33, 48, 61], jnp.int32)
    new_feats = jax.random.normal(k_new, (2, DIM), jnp.float32)

    ctx = {"frame": 5.0}
    obs = {"features": obs_feats, "indices": obs_idx}
    new = {"features": new_feats}

    # Pure-JAX references computed BEFORE the kernels run (the write path
    # donates the state buffers so they are updated in place).
    ref_mem, ref_times = _write_ref(memory.mem_feats, memory.mem_times,
                                    obs_feats, obs_idx, 0.9, 5.0)
    ref_read = _read_ref(ref_mem, ref_times, memory.proj_w, 7.0, 0.1)
    jax.block_until_ready((ref_mem, ref_times, ref_read))

    # forward(write=True, ...)
    new_mem, new_times = rw(True, (ctx, obs, new))
    jax.block_until_ready((new_mem, new_times))

    # forward(write=False, ...)
    readout = rw(False, (7.0,))
    jax.block_until_ready(readout)

    # Fused write+read on an identically-seeded second memory.
    memory2 = TrackletMemory(num_slots=N_SLOTS, feature_dim=DIM)
    f_mem, f_times, f_read = memory2.write_read(ctx, obs, new, 7.0)
    jax.block_until_ready((f_mem, f_times, f_read))

    # Silent correctness checks (bf16 MXU operands -> relaxed tolerances).
    assert jnp.allclose(new_mem, ref_mem, atol=5e-3, rtol=5e-3)
    assert jnp.allclose(new_times, ref_times, atol=1e-5)
    assert jnp.allclose(readout, ref_read, atol=2e-2, rtol=2e-2)
    assert jnp.allclose(f_mem, ref_mem, atol=5e-3, rtol=5e-3)
    assert jnp.allclose(f_times, ref_times, atol=1e-5)
    assert jnp.allclose(f_read, ref_read, atol=2e-2, rtol=2e-2)

    print("KERNEL_OK")
</pallas_src>

<mosaic_0001>
module attributes {stable_mosaic.version = 11 : i64} {
  func.func @_write_kernel(%arg0: memref<64x128xf32, #tpu.memory_space<vmem>>, %arg1: memref<1x64xf32, #tpu.memory_space<vmem>>, %arg2: memref<8x128xf32, #tpu.memory_space<vmem>>, %arg3: memref<1x8xi32, #tpu.memory_space<vmem>>, %arg4: memref<1xf32, #tpu.memory_space<smem>>, %arg5: memref<1xf32, #tpu.memory_space<smem>>, %arg6: memref<64x128xf32, #tpu.memory_space<vmem>>, %arg7: memref<1x64xf32, #tpu.memory_space<vmem>>) attributes {dimension_semantics = [], scalar_prefetch = 0 : i64, scratch_operands = 0 : i64, tpu.core_type = #tpu.core_type<tc>} {
    %c0 = arith.constant 0 : index
    %c0_0 = arith.constant 0 : index
    %0 = vector.load %arg0[%c0, %c0_0] : memref<64x128xf32, #tpu.memory_space<vmem>>, vector<64x128xf32>
    %c0_1 = arith.constant 0 : index
    %c0_2 = arith.constant 0 : index
    %1 = vector.load %arg1[%c0_1, %c0_2] : memref<1x64xf32, #tpu.memory_space<vmem>>, vector<1x64xf32>
    %c0_3 = arith.constant 0 : index
    %c0_4 = arith.constant 0 : index
    %2 = vector.load %arg2[%c0_3, %c0_4] : memref<8x128xf32, #tpu.memory_space<vmem>>, vector<8x128xf32>
    %c0_5 = arith.constant 0 : index
    %c0_6 = arith.constant 0 : index
    %3 = vector.load %arg3[%c0_5, %c0_6] : memref<1x8xi32, #tpu.memory_space<vmem>>, vector<1x8xi32>
    %c0_7 = arith.constant 0 : index
    %4 = memref.load %arg4[%c0_7] : memref<1xf32, #tpu.memory_space<smem>>
    %c0_8 = arith.constant 0 : index
    %5 = memref.load %arg5[%c0_8] : memref<1xf32, #tpu.memory_space<smem>>
    %6 = tpu.iota {dimensions = array<i32: 0>} : vector<64x8xi32>
    %7 = vector.broadcast %3 : vector<1x8xi32> to vector<64x8xi32>
    %8 = arith.cmpi eq, %6, %7 : vector<64x8xi32>
    %cst = arith.constant 1.000000e+00 : f32
    %cst_9 = arith.constant 0.000000e+00 : f32
    %9 = vector.broadcast %cst : f32 to vector<64x8xf32>
    %10 = vector.broadcast %cst_9 : f32 to vector<64x8xf32>
    %11 = arith.select %8, %9, %10 : vector<64x8xi1>, vector<64x8xf32>
    %12 = arith.truncf %11 : vector<64x8xf32> to vector<64x8xbf16>
    %13 = arith.truncf %2 : vector<8x128xf32> to vector<8x128xbf16>
    %cst_10 = arith.constant dense<0.000000e+00> : vector<64x128xf32>
    %14 = tpu.matmul %12, %13, %cst_10 {dimension_numbers = #tpu.dot_dimension_numbers<[1], [0], [0], [1], [0, 0, 1, 1], [], []>} : vector<64x8xbf16>, vector<8x128xbf16>, vector<64x128xf32> -> vector<64x128xf32>
    %cst_11 = arith.constant dense<0.000000e+00> : vector<64xf32>
    %15 = vector.multi_reduction <add>, %11, %cst_11 [1] : vector<64x8xf32> to vector<64xf32>
    %16 = vector.shape_cast %15 : vector<64xf32> to vector<64x1xf32>
    %cst_12 = arith.constant 1.000000e+00 : f32
    %17 = vector.broadcast %cst_12 : f32 to vector<64x1xf32>
    %18 = arith.minimumf %16, %17 : vector<64x1xf32>
    %19 = tpu.iota {dimensions = array<i32: 0>} : vector<64x64xi32>
    %20 = tpu.iota {dimensions = array<i32: 1>} : vector<64x64xi32>
    %21 = arith.cmpi eq, %19, %20 : vector<64x64xi32>
    %22 = vector.shape_cast %18 : vector<64x1xf32> to vector<64x1xf32>
    %23 = vector.broadcast %22 : vector<64x1xf32> to vector<64x64xf32>
    %cst_13 = arith.constant 0.000000e+00 : f32
    %24 = vector.broadcast %cst_13 : f32 to vector<64x64xf32>
    %25 = arith.select %21, %23, %24 : vector<64x64xi1>, vector<64x64xf32>
    %cst_14 = arith.constant dense<0.000000e+00> : vector<64xf32>
    %26 = vector.multi_reduction <add>, %25, %cst_14 [0] : vector<64x64xf32> to vector<64xf32>
    %27 = vector.shape_cast %26 : vector<64xf32> to vector<1x64xf32>
    %cst_15 = arith.constant 1.000000e+00 : f32
    %28 = arith.subf %cst_15, %4 : f32
    %29 = vector.broadcast %28 : f32 to vector<64x1xf32>
    %30 = arith.mulf %29, %18 : vector<64x1xf32>
    %cst_16 = arith.constant 1.000000e+00 : f32
    %31 = vector.broadcast %cst_16 : f32 to vector<64x1xf32>
    %32 = arith.subf %31, %30 : vector<64x1xf32>
    %33 = vector.broadcast %32 : vector<64x1xf32> to vector<64x128xf32>
    %34 = arith.mulf %0, %33 : vector<64x128xf32>
    %35 = vector.broadcast %28 : f32 to vector<64x128xf32>
    %36 = arith.mulf %35, %14 : vector<64x128xf32>
    %37 = arith.addf %34, %36 : vector<64x128xf32>
    %cst_17 = arith.constant 1.000000e+00 : f32
    %38 = vector.broadcast %cst_17 : f32 to vector<1x64xf32>
    %39 = arith.subf %38, %27 : vector<1x64xf32>
    %40 = arith.mulf %1, %39 : vector<1x64xf32>
    %41 = vector.broadcast %5 : f32 to vector<1x64xf32>
    %42 = arith.mulf %41, %27 : vector<1x64xf32>
    %43 = arith.addf %40, %42 : vector<1x64xf32>
    %c0_18 = arith.constant 0 : index
    %c0_19 = arith.constant 0 : index
    %44 = vector.load %arg6[%c0_18, %c0_19] : memref<64x128xf32, #tpu.memory_space<vmem>>, vector<64x128xf32>
    tpu.vector_store %arg6[%c0_18, %c0_19], %37 {strides = array<i32>} : memref<64x128xf32, #tpu.memory_space<vmem>>, vector<64x128xf32>,
    %c0_20 = arith.constant 0 : index
    %c0_21 = arith.constant 0 : index
    %45 = vector.load %arg7[%c0_20, %c0_21] : memref<1x64xf32, #tpu.memory_space<vmem>>, vector<1x64xf32>
    tpu.vector_store %arg7[%c0_20, %c0_21], %43 {strides = array<i32>} : memref<1x64xf32, #tpu.memory_space<vmem>>, vector<1x64xf32>,
    return
  }
}

</mosaic_0001>

<llo_original>
// kernel: memory_write.1
$region0: #{memory_write.1}
  #allocation0 [shape = 'u32[]', space=smem, size = 0x4, offset = 0x4, fixed_abs, tag = 'smem constant byte address 0x4 - core index']
  #allocation1 [shape = 'u32[144,128]{1,0:T(1,128)}', space=vmem, size = 0x12000, scoped, tag = 'internal scratch']
  #allocation2 [shape = 'f32[1]{0:T(128)S(6)}', space=smem, size = 0x200, scoped, tag = 'scoped memory for memory_write.1']
  #allocation3 [shape = 'f32[1]{0:T(128)S(6)}', space=smem, size = 0x200, scoped, tag = 'scoped memory for memory_write.1']
  %s0 = inlined_call_operand.hbm [shape: f32[64,128], index: 0, kind: input, shape index: {}, may-alias: {0,6}]
  %s1 = inlined_call_operand.hbm [shape: f32[1,64], index: 1, kind: input, shape index: {}, may-alias: {1,7}]
  %s2 = inlined_call_operand.hbm [shape: f32[8,128], index: 2, kind: input, shape index: {}]
  %s3 = inlined_call_operand.vmem [shape: s32[1,8], index: 3, kind: input, shape index: {}]
  %s4 = inlined_call_operand.<no memory space> [shape: f32[1], index: 4, kind: input, shape index: {}]
  %s5 = inlined_call_operand.<no memory space> [shape: f32[1], index: 5, kind: input, shape index: {}]
  %s6 = inlined_call_operand.hbm [shape: f32[64,128], index: 6, kind: output, shape index: {0}, may-alias: {0,6}]
  %s7 = inlined_call_operand.hbm [shape: f32[1,64], index: 7, kind: output, shape index: {1}, may-alias: {1,7}]
  %8 = xla_tuple %s6, %s7
  %s9 = sld [smem:[#allocation0]]
  $region54: #{memory_write.1} parent=0
    _
  %s11 = ssub.s32 1, %s9
  %s12 = scalar_select 0, %s11, %s9
  %13 = sst [smem:[#allocation2]] %s4
  %14 = sst [smem:[#allocation3]] %s5
  $region1: #{memory_write.1} parent=0
    #allocation4 [shape = 'u8[32768]{0}', space=vmem, size = 0x8000, scoped, tag = 'input window, operand 0, single buffered']
    #allocation5 [shape = 's32[1]{0}', space=sflag, size = 0x4, scoped, tag = 'scoped memory for memory_write.1']
    #allocation6 [shape = 's32[1]{0}', space=sflag, size = 0x4, scoped, tag = 'scoped memory for memory_write.1']
    #allocation7 [shape = 'u8[512]{0}', space=vmem, size = 0x400, scoped, tag = 'input window, operand 1, single buffered']
    #allocation8 [shape = 's32[1]{0}', space=sflag, size = 0x4, scoped, tag = 'scoped memory for memory_write.1']
    #allocation9 [shape = 'u8[4096]{0}', space=vmem, size = 0x1000, scoped, tag = 'input window, operand 2, single buffered']
    #allocation10 [shape = 'u8[32768]{0}', space=vmem, size = 0x8000, scoped, tag = 'output window, operand 0, single buffered']
    #allocation11 [shape = 'u8[512]{0}', space=vmem, size = 0x400, scoped, tag = 'output window, operand 1, single buffered']
    #allocation12 [shape = 's32[1]{0}', space=sflag, size = 0x4, scoped, tag = 'scoped memory for memory_write.1']
    %15 = vsyncpa [#allocation5], 0
    %16 = vsyncpa [#allocation8], 0
    %17 = vsyncpa [#allocation6], 0
    %18 = vsyncpa [#allocation12], 0
    // Predicated region
    $region2: #{memory_write.1} parent=1 // pred_check
      _
    $region3: #{memory_write.1} parent=1 // pred_check_branch
      %20 = sbr.rel (0) target = $region5
    $region4: #{memory_write.1} parent=1 // pred_region
      %s22 = ssub.s32 1024, 1024
      %23 = vsyncadd [#allocation5], %s22
      %s24 = sshll.u32 [#allocation4], 4
      %s25 = int_to_ptr.vmem [resolvable:$true] %s24
      %30 = dma.hbm_to_vmem [thread:$0]  %s0, 1024, %s25, [#allocation5], 128, 128, 8
    $region5: #{memory_write.1} parent=1 // pred_fallthru
      _
    // Predicated region
    $region6: #{memory_write.1} parent=1 // pred_check
      _
    $region7: #{memory_write.1} parent=1 // pred_check_branch
      %32 = sbr.rel (0) target = $region9
    $region8: #{memory_write.1} parent=1 // pred_region
      %s34 = ssub.s32 16, 16
      %35 = vsyncadd [#allocation8], %s34
      %s37 = sshll.u32 [#allocation7], 4
      %s38 = int_to_ptr.vmem [resolvable:$true] %s37
      %40 = dma.hbm_to_vmem [thread:$0]  %s1, 16, %s38, [#allocation8]
    $region9: #{memory_write.1} parent=1 // pred_fallthru
      _
    // Predicated region
    $region10: #{memory_write.1} parent=1 // pred_check
      _
    $region11: #{memory_write.1} parent=1 // pred_check_branch
      %42 = sbr.rel (0) target = $region13
    $region12: #{memory_write.1} parent=1 // pred_region
      %s44 = ssub.s32 128, 128
      %45 = vsyncadd [#allocation8], %s44
      %s47 = sshll.u32 [#allocation9], 4
      %s48 = int_to_ptr.vmem [resolvable:$true] %s47
      %50 = dma.hbm_to_vmem [thread:$0]  %s2, 128, %s48, [#allocation8]
    $region13: #{memory_write.1} parent=1 // pred_fallthru
      _
    // Predicated region
    $region14: #{memory_write.1} parent=1 // pred_check
      _
    $region15: #{memory_write.1} parent=1 // pred_check_branch
      %52 = sbr.rel (0) target = $region17
    $region16: #{memory_write.1} parent=1 // pred_region
      _
    $region17: #{memory_write.1} parent=1 // pred_fallthru
      _
    // Predicated region
    $region18: #{memory_write.1} parent=1 // pred_check
      _
    $region19: #{memory_write.1} parent=1 // pred_check_branch
      %54 = sbr.rel (0) target = $region21
    $region20: #{memory_write.1} parent=1 // pred_region
      _
    $region21: #{memory_write.1} parent=1 // pred_fallthru
      _
    // Predicated region
    $region22: #{memory_write.1} parent=1 // pred_check
      _
    $region23: #{memory_write.1} parent=1 // pred_check_branch
      %56 = sbr.rel (0) target = $region25
    $region24: #{memory_write.1} parent=1 // pred_region
      _
    $region25: #{memory_write.1} parent=1 // pred_fallthru
      _
    // Predicated region
    $region26: #{memory_write.1} parent=1 // pred_check
      _
    $region27: #{memory_write.1} parent=1 // pred_check_branch
      %58 = sbr.rel (0) target = $region29
    $region28: #{memory_write.1} parent=1 // pred_region
      %59 = dma.done [#allocation5], 1024
    $region29: #{memory_write.1} parent=1 // pred_fallthru
      _
    // Predicated region
    $region30: #{memory_write.1} parent=1 // pred_check
      _
    $region31: #{memory_write.1} parent=1 // pred_check_branch
      %61 = sbr.rel (0) target = $region33
    $region32: #{memory_write.1} parent=1 // pred_region
      %62 = dma.done [#allocation8], 16
    $region33: #{memory_write.1} parent=1 // pred_fallthru
      _
    // Predicated region
    $region34: #{memory_write.1} parent=1 // pred_check
      _
    $region35: #{memory_write.1} parent=1 // pred_check_branch
      %64 = sbr.rel (0) target = $region37
    $region36: #{memory_write.1} parent=1 // pred_region
      %65 = dma.done [#allocation8], 128
    $region37: #{memory_write.1} parent=1 // pred_fallthru
      _
    %v67 = vld [vmem:[#allocation4] sm:$0xff]
    %v68 = vld [vmem:[#allocation4 + $0x8] sm:$0xff]
    %v69 = vld [vmem:[#allocation4 + $0x10] sm:$0xff]
    %v70 = vld [vmem:[#allocation4 + $0x18] sm:$0xff]
    %v71 = vld [vmem:[#allocation4 + $0x20] sm:$0xff]
    %v72 = vld [vmem:[#allocation4 + $0x28] sm:$0xff]
    %v73 = vld [vmem:[#allocation4 + $0x30] sm:$0xff]
    %v74 = vld [vmem:[#allocation4 + $0x38] sm:$0xff]
    %v75 = vld [vmem:[#allocation7] sm:$0x1]
    %v76 = vld [vmem:[#allocation9] sm:$0xff]
    %v77 = vld [vmem:[%s3] sm:$0x1]
    %s78 = sld [smem:[#allocation2]]
    %s79 = sld [smem:[#allocation3]]
    %v80 = vlaneseq
    %v81 = vshrl.u32 %v80, 7
    %v82 = vadd.s32 %v81, 8
    %v83 = vadd.s32 %v81, 16
    %v84 = vadd.s32 %v81, 24
    %v85 = vadd.s32 %v81, 32
    %v86 = vadd.s32 %v81, 40
    %v87 = vadd.s32 %v81, 48
    %v88 = vadd.s32 %v81, 56
    %v89 = vlaneseq
    %v90 = vshrl.u32 %v89, 7
    %v91 = vsub.s32 0, %v90
    %v92 = vrot.slane %v77, %v91
    %vm93 = vcmp.eq.s32.totalorder %v81, %v92
    %vm94 = vcmp.eq.s32.totalorder %v82, %v92
    %vm95 = vcmp.eq.s32.totalorder %v83, %v92
    %vm96 = vcmp.eq.s32.totalorder %v84, %v92
    %vm97 = vcmp.eq.s32.totalorder %v85, %v92
    %vm98 = vcmp.eq.s32.totalorder %v86, %v92
    %vm99 = vcmp.eq.s32.totalorder %v87, %v92
    %vm100 = vcmp.eq.s32.totalorder %v88, %v92
    %v101 = vsel %vm93, 1.0, 0.0
    %v102 = vsel %vm94, 1.0, 0.0
    %v103 = vsel %vm95, 1.0, 0.0
    %v104 = vsel %vm96, 1.0, 0.0
    %v105 = vsel %vm97, 1.0, 0.0
    %v106 = vsel %vm98, 1.0, 0.0
    %v107 = vsel %vm99, 1.0, 0.0
    %v108 = vsel %vm100, 1.0, 0.0
    %v109 = vpack.c.bf16 %v102, %v101
    %v110 = vpack.c.bf16 %v104, %v103
    %v111 = vpack.c.bf16 %v106, %v105
    %v112 = vpack.c.bf16 %v108, %v107
    %v113 = vpack.c.bf16 %v76, %v76
    %vm114 = vcmask 64512
    %v116 = vsel %vm114, %v109, 0
    %v119 = vsel %vm114, %v110, 0
    %v122 = vsel %vm114, %v111, 0
    %v125 = vsel %vm114, %v112, 0
    %vm127 = vcmask 1043456
    %v129 = vsel %vm127, %v113, 0
    %131 = vmatprep.subr.bf16.mxu0 0
    %132 = vmatpush1.bf16.msra.mxu0 0
    %133 = vmatprep.subr.bf16.mxu0 0
    %134 = vmatpush1.bf16.msra.mxu0 0
    %135 = vmatprep.subr.bf16.mxu0 0
    %136 = vmatpush1.bf16.msra.mxu0 0
    %137 = vmatprep.subr.bf16.mxu0 0
    %138 = vmatpush1.bf16.msra.mxu0 0
    %139 = vmatprep.subr.bf16.mxu0 0
    %140 = vmatpush1.bf16.msra.mxu0 0
    %141 = vmatprep.subr.bf16.mxu0 0
    %142 = vmatpush1.bf16.msra.mxu0 0
    %143 = vmatprep.subr.bf16.mxu0 0
    %144 = vmatpush1.bf16.msra.mxu0 0
    %145 = vmatprep.subr.bf16.mxu0 0
    %146 = vmatpush1.bf16.msra.mxu0 %v129
    %147 = vmatprep.subr.bf16.mxu0 0
    %148 = vmatpush2.bf16.msra.mxu0 0
    %149 = vmatprep.subr.bf16.mxu0 0
    %150 = vmatpush2.bf16.msra.mxu0 0
    %151 = vmatprep.subr.bf16.mxu0 0
    %152 = vmatpush2.bf16.msra.mxu0 0
    %153 = vmatprep.subr.bf16.mxu0 0
    %154 = vmatpush2.bf16.msra.mxu0 0
    %155 = vmatprep.subr.bf16.mxu0 0
    %156 = vmatpush2.bf16.msra.mxu0 0
    %157 = vmatprep.subr.bf16.mxu0 0
    %158 = vmatpush2.bf16.msra.mxu0 0
    %159 = vmatprep.subr.bf16.mxu0 0
    %160 = vmatpush2.bf16.msra.mxu0 0
    %161 = vmatprep.subr.bf16.mxu0 0
    %162 = vmatpush2.bf16.msra.mxu0 0
    %163 = vmatprep.mubr.bf16.mxu0 0
    %164 = vmatmul.mubr.bf16.gmra.mxu0 %v116
    %v165 = vpop.f32.mrf.mxu0
    %v166 = vadd.f32 0.0, %v165
    %v167 = vpop.f32.mrf.mxu0
    %v168 = vpop.f32.mrf.mxu0
    %v169 = vadd.f32 0.0, %v168
    %v170 = vpop.f32.mrf.mxu0
    %171 = vmatprep.mubr.bf16.mxu0 0
    %172 = vmatmul.mubr.bf16.gmra.mxu0 %v119
    %v173 = vpop.f32.mrf.mxu0
    %v174 = vadd.f32 0.0, %v173
    %v175 = vpop.f32.mrf.mxu0
    %v176 = vpop.f32.mrf.mxu0
    %v177 = vadd.f32 0.0, %v176
    %v178 = vpop.f32.mrf.mxu0
    %179 = vmatprep.mubr.bf16.mxu0 0
    %180 = vmatmul.mubr.bf16.gmra.mxu0 %v122
    %v181 = vpop.f32.mrf.mxu0
    %v182 = vadd.f32 0.0, %v181
    %v183 = vpop.f32.mrf.mxu0
    %v184 = vpop.f32.mrf.mxu0
    %v185 = vadd.f32 0.0, %v184
    %v186 = vpop.f32.mrf.mxu0
    %187 = vmatprep.mubr.bf16.mxu0 0
    %188 = vmatmul.mubr.bf16.gmra.mxu0 %v125
    %v189 = vpop.f32.mrf.mxu0
    %v190 = vadd.f32 0.0, %v189
    %v191 = vpop.f32.mrf.mxu0
    %v192 = vpop.f32.mrf.mxu0
    %v193 = vadd.f32 0.0, %v192
    %v194 = vpop.f32.mrf.mxu0
    %195 = vdwg.mxu0
    %v196 = vsel %vm114, %v101, 0.0
    %197 = vadd.xlane.f32.xlu0 %v196
    %v198 = vpop.xlane.xlu0 %197
    %v199 = vsel %vm114, %v102, 0.0
    %200 = vadd.xlane.f32.xlu0 %v199
    %v201 = vpop.xlane.xlu0 %200
    %v202 = vsel %vm114, %v103, 0.0
    %203 = vadd.xlane.f32.xlu0 %v202
    %v204 = vpop.xlane.xlu0 %203
    %v205 = vsel %vm114, %v104, 0.0
    %206 = vadd.xlane.f32.xlu0 %v205
    %v207 = vpop.xlane.xlu0 %206
    %v208 = vsel %vm114, %v105, 0.0
    %209 = vadd.xlane.f32.xlu0 %v208
    %v210 = vpop.xlane.xlu0 %209
    %v211 = vsel %vm114, %v106, 0.0
    %212 = vadd.xlane.f32.xlu0 %v211
    %v213 = vpop.xlane.xlu0 %212
    %v214 = vsel %vm114, %v107, 0.0
    %215 = vadd.xlane.f32.xlu0 %v214
    %v216 = vpop.xlane.xlu0 %215
    %v217 = vsel %vm114, %v108, 0.0
    %218 = vadd.xlane.f32.xlu0 %v217
    %v219 = vpop.xlane.xlu0 %218
    %v220 = vmin.f32 %v198, 1.0
    %v221 = vmin.f32 %v201, 1.0
    %v222 = vmin.f32 %v204, 1.0
    %v223 = vmin.f32 %v207, 1.0
    %v224 = vmin.f32 %v210, 1.0
    %v225 = vmin.f32 %v213, 1.0
    %v226 = vmin.f32 %v216, 1.0
    %v227 = vmin.f32 %v219, 1.0
    %v228 = vlaneseq
    %v229 = vand.u32 %v228, 127
    %vm230 = vcmp.eq.s32.totalorder %v81, %v229
    %vm231 = vcmp.eq.s32.totalorder %v82, %v229
    %vm232 = vcmp.eq.s32.totalorder %v83, %v229
    %vm233 = vcmp.eq.s32.totalorder %v84, %v229
    %vm234 = vcmp.eq.s32.totalorder %v85, %v229
    %vm235 = vcmp.eq.s32.totalorder %v86, %v229
    %vm236 = vcmp.eq.s32.totalorder %v87, %v229
    %vm237 = vcmp.eq.s32.totalorder %v88, %v229
    %v238 = vsel %vm230, %v220, 0.0
    %v239 = vsel %vm231, %v221, 0.0
    %v240 = vsel %vm232, %v222, 0.0
    %v241 = vsel %vm233, %v223, 0.0
    %v242 = vsel %vm234, %v224, 0.0
    %v243 = vsel %vm235, %v225, 0.0
    %v244 = vsel %vm236, %v226, 0.0
    %v245 = vsel %vm237, %v227, 0.0
    %vm246 = vcmask 523264
    %v247 = vsel %vm246, %v238, 0.0
    %v248 = vsel %vm246, %v239, 0.0
    %v249 = vadd.f32 %v247, %v248
    %v250 = vsel %vm246, %v240, 0.0
    %v251 = vadd.f32 %v249, %v250
    %v252 = vsel %vm246, %v241, 0.0
    %v253 = vadd.f32 %v251, %v252
    %v254 = vsel %vm246, %v242, 0.0
    %v255 = vadd.f32 %v253, %v254
    %v256 = vsel %vm246, %v243, 0.0
    %v257 = vadd.f32 %v255, %v256
    %v258 = vsel %vm246, %v244, 0.0
    %v259 = vadd.f32 %v257, %v258
    %v260 = vsel %vm246, %v245, 0.0
    %v261 = vadd.f32 %v259, %v260
    %v262 = vrot.slane %v261, 4
    %v263 = vadd.f32 %v261, %v262
    %v264 = vrot.slane %v263, 2
    %v265 = vadd.f32 %v263, %v264
    %v266 = vrot.slane %v265, 1
    %v267 = vadd.f32 %v265, %v266
    %s268 = ssub.f32 1.0, %s78
    %v269 = vstv %s268
    %v270 = vmul.f32 %v269, %v220
    %v271 = vmul.f32 %v269, %v221
    %v272 = vmul.f32 %v269, %v222
    %v273 = vmul.f32 %v269, %v223
    %v274 = vmul.f32 %v269, %v224
    %v275 = vmul.f32 %v269, %v225
    %v276 = vmul.f32 %v269, %v226
    %v277 = vmul.f32 %v269, %v227
    %v278 = vsub.f32 1.0, %v270
    %v279 = vsub.f32 1.0, %v271
    %v280 = vsub.f32 1.0, %v272
    %v281 = vsub.f32 1.0, %v273
    %v282 = vsub.f32 1.0, %v274
    %v283 = vsub.f32 1.0, %v275
    %v284 = vsub.f32 1.0, %v276
    %v285 = vsub.f32 1.0, %v277
    %v286 = vmul.f32 %v67, %v278
    %v287 = vmul.f32 %v68, %v279
    %v288 = vmul.f32 %v69, %v280
    %v289 = vmul.f32 %v70, %v281
    %v290 = vmul.f32 %v71, %v282
    %v291 = vmul.f32 %v72, %v283
    %v292 = vmul.f32 %v73, %v284
    %v293 = vmul.f32 %v74, %v285
    %v294 = vmul.f32 %v269, %v166
    %v295 = vmul.f32 %v269, %v169
    %v296 = vmul.f32 %v269, %v174
    %v297 = vmul.f32 %v269, %v177
    %v298 = vmul.f32 %v269, %v182
    %v299 = vmul.f32 %v269, %v185
    %v300 = vmul.f32 %v269, %v190
    %v301 = vmul.f32 %v269, %v193
    %v302 = vadd.f32 %v286, %v294
    %v303 = vadd.f32 %v287, %v295
    %v304 = vadd.f32 %v288, %v296
    %v305 = vadd.f32 %v289, %v297
    %v306 = vadd.f32 %v290, %v298
    %v307 = vadd.f32 %v291, %v299
    %v308 = vadd.f32 %v292, %v300
    %v309 = vadd.f32 %v293, %v301
    %v310 = vsub.f32 1.0, %v267
    %v311 = vmul.f32 %v75, %v310
    %v312 = vstv %s79
    %v313 = vmul.f32 %v312, %v267
    %v314 = vadd.f32 %v311, %v313
    %315 = vst [vmem:[#allocation10] sm:$0xff] %v302
    %316 = vst [vmem:[#allocation10 + $0x8] sm:$0xff] %v303
    %317 = vst [vmem:[#allocation10 + $0x10] sm:$0xff] %v304
    %318 = vst [vmem:[#allocation10 + $0x18] sm:$0xff] %v305
    %319 = vst [vmem:[#allocation10 + $0x20] sm:$0xff] %v306
    %320 = vst [vmem:[#allocation10 + $0x28] sm:$0xff] %v307
    %321 = vst [vmem:[#allocation10 + $0x30] sm:$0xff] %v308
    %322 = vst [vmem:[#allocation10 + $0x38] sm:$0xff] %v309
    %vm323 = vcmask 516096
    %324 = vst.msk [vmem:[#allocation11] sm:$0x1] %vm323, %v314
    // Predicated region
    $region38: #{memory_write.1} parent=1 // pred_check
      _
    $region39: #{memory_write.1} parent=1 // pred_check_branch
      %326 = sbr.rel (0) target = $region41
    $region40: #{memory_write.1} parent=1 // pred_region
      %s328 = ssub.s32 1024, 1024
      %329 = vsyncadd [#allocation6], %s328
      %s330 = sshll.u32 [#allocation10], 4
      %s331 = int_to_ptr.vmem [resolvable:$true] %s330
      %336 = dma.vmem_to_hbm [thread:$0]  %s331, 1024, %s6, [#allocation6], 128, 128, 8
    $region41: #{memory_write.1} parent=1 // pred_fallthru
      _
    // Predicated region
    $region42: #{memory_write.1} parent=1 // pred_check
      _
    $region43: #{memory_write.1} parent=1 // pred_check_branch
      %338 = sbr.rel (0) target = $region45
    $region44: #{memory_write.1} parent=1 // pred_region
      %s340 = ssub.s32 16, 16
      %341 = vsyncadd [#allocation12], %s340
      %s343 = sshll.u32 [#allocation11], 4
      %s344 = int_to_ptr.vmem [resolvable:$true] %s343
      %346 = dma.vmem_to_hbm [thread:$0]  %s344, 16, %s7, [#allocation12]
    $region45: #{memory_write.1} parent=1 // pred_fallthru
      _
    // Predicated region
    $region46: #{memory_write.1} parent=1 // pred_check
      _
    $region47: #{memory_write.1} parent=1 // pred_check_branch
      %348 = sbr.rel (0) target = $region49
    $region48: #{memory_write.1} parent=1 // pred_region
      %349 = dma.done [#allocation6], 1024
    $region49: #{memory_write.1} parent=1 // pred_fallthru
      _
    // Predicated region
    $region50: #{memory_write.1} parent=1 // pred_check
      _
    $region51: #{memory_write.1} parent=1 // pred_check_branch
      %351 = sbr.rel (0) target = $region53
    $region52: #{memory_write.1} parent=1 // pred_region
      %352 = dma.done [#allocation12], 16
    $region53: #{memory_write.1} parent=1 // pred_fallthru
      _
    %353 = vsyncpa [#allocation5], 1
    %354 = vsyncpa [#allocation8], 1
    %355 = vsyncpa [#allocation6], 1
    %356 = vsyncpa [#allocation12], 1

</llo_original>
